<compile_context>
chip_gen: v6e
topology: v6e:2x2x1
jax: 0.10.0
libtpu: 0.0.40
codegen_flags: <defaults>
</compile_context>

<pallas_src>
import functools

import jax
import jax.numpy as jnp
from jax.experimental import pallas as pl
from jax.experimental.pallas import tpu as pltpu


def _meil_kernel(rgb_res_ref, rgb_tgt_ref, is_rep_ref, opacity_ref,
                 ws_ref, deltas_ref, ts_ref, tri_ref,
                 per_ray_ref, dist_ref,
                 *, lambda_opacity, lambda_distortion):
    # ---------------- RGB per-ray partials (rays on lanes) ----------------
    is_rep = is_rep_ref[...]                                   # (1, TR)
    new_mask = (is_rep == 0.0).astype(jnp.float32)             # is_rep == 0
    old_mask = (is_rep == 1.0).astype(jnp.float32)             # is_rep == 1

    diff = rgb_res_ref[...] - rgb_tgt_ref[...]                 # (C, TR)
    sq = diff * diff
    sq_new = jnp.sum(sq, axis=0, keepdims=True) * new_mask     # (1, TR)
    charb = jnp.sqrt(sq + 1e-6)                                # 0.001 ** 2
    charb_old = jnp.sum(charb, axis=0, keepdims=True) * old_mask

    # ---------------- Opacity entropy (elementwise, lane-dense) ----------------
    o = opacity_ref[...] + 1e-10                               # (1, TR)
    op_ent = lambda_opacity * (-o * jnp.log(o))

    per_ray_ref[0:1, :] = sq_new
    per_ray_ref[1:2, :] = charb_old
    per_ray_ref[2:3, :] = op_ent

    # ---------------- Distortion loss (Mip-NeRF 360 / DVGO-v2) ----------------
    ws = ws_ref[...]                                           # (TR, S)
    deltas = deltas_ref[...]
    ts = ts_ref[...]
    wts = ws * ts

    tri = tri_ref[...]                                         # (S, S), tri[j,i]=1 iff j<i
    # exclusive prefix sums along the sample axis via MXU matmul (f32 acc)
    w_excl = jnp.dot(ws, tri, preferred_element_type=jnp.float32)
    wt_excl = jnp.dot(wts, tri, preferred_element_type=jnp.float32)

    per_sample = (2.0 * (wts * w_excl - ws * wt_excl)
                  + (1.0 / 3.0) * (ws * ws * deltas))
    dist_ref[...] = lambda_distortion * jnp.sum(per_sample, axis=1, keepdims=True)


def _round_up(x, m):
    return (x + m - 1) // m * m


def _auto_tile_rays(R, S):
    # Cap ws/deltas/ts per step at ~4 MiB (double-buffered -> ~8 MiB), leaving
    # generous headroom for intermediates even on v7x's 64 MiB VMEM.
    tr = 1024
    while tr > 128 and 3 * tr * S * 4 > (4 << 20):
        tr //= 2
    return min(tr, _round_up(max(R, 1), 128))


def meil_nerf_loss(results, target, lambda_p,
                   lambda_opacity=0.001, lambda_distortion=0.001,
                   tile_rays=None):
    res_rgb = results['rgb'].astype(jnp.float32)               # (R, C)
    tgt_rgb = target['rgb'].astype(jnp.float32)
    R, C = res_rgb.shape

    N = results['ws'].shape[0]
    S = N // R                                                 # uniform samples / ray

    TR = tile_rays if tile_rays is not None else _auto_tile_rays(R, S)
    R_pad = _round_up(R, TR)
    num_tiles = R_pad // TR
    pad_r = R_pad - R

    # lane-major layouts for the small per-ray tensors (rays on lanes)
    rgb_res_t = res_rgb.T                                      # (C, R)
    rgb_tgt_t = tgt_rgb.T
    is_rep = target['is_rep'].astype(jnp.float32).reshape(1, R)
    opacity = results['opacity'].astype(jnp.float32).reshape(1, R)

    ws = results['ws'].astype(jnp.float32).reshape(R, S)
    deltas = results['deltas'].astype(jnp.float32).reshape(R, S)
    ts = results['ts'].astype(jnp.float32).reshape(R, S)

    if pad_r:
        rgb_res_t = jnp.pad(rgb_res_t, ((0, 0), (0, pad_r)))
        rgb_tgt_t = jnp.pad(rgb_tgt_t, ((0, 0), (0, pad_r)))
        # pad is_rep with -1 so padded rays belong to neither new nor old set
        is_rep = jnp.pad(is_rep, ((0, 0), (0, pad_r)), constant_values=-1.0)
        opacity = jnp.pad(opacity, ((0, 0), (0, pad_r)), constant_values=1.0)
        ws = jnp.pad(ws, ((0, pad_r), (0, 0)))
        deltas = jnp.pad(deltas, ((0, pad_r), (0, 0)))
        ts = jnp.pad(ts, ((0, pad_r), (0, 0)))

    # strictly-lower selector (j < i) for the exclusive prefix, hoisted out of
    # the per-step body and kept resident across the grid
    row = jax.lax.broadcasted_iota(jnp.int32, (S, S), 0)
    col = jax.lax.broadcasted_iota(jnp.int32, (S, S), 1)
    tri = (row < col).astype(jnp.float32)

    kernel = functools.partial(_meil_kernel,
                               lambda_opacity=float(lambda_opacity),
                               lambda_distortion=float(lambda_distortion))

    per_ray, dist = pl.pallas_call(
        kernel,
        grid=(num_tiles,),
        in_specs=[
            pl.BlockSpec((C, TR), lambda i: (0, i)),           # rgb results
            pl.BlockSpec((C, TR), lambda i: (0, i)),           # rgb target
            pl.BlockSpec((1, TR), lambda i: (0, i)),           # is_rep
            pl.BlockSpec((1, TR), lambda i: (0, i)),           # opacity
            pl.BlockSpec((TR, S), lambda i: (i, 0)),           # ws
            pl.BlockSpec((TR, S), lambda i: (i, 0)),           # deltas
            pl.BlockSpec((TR, S), lambda i: (i, 0)),           # ts
            pl.BlockSpec((S, S), lambda i: (0, 0)),            # tri (resident)
        ],
        out_specs=(
            pl.BlockSpec((3, TR), lambda i: (0, i)),           # per-ray partials
            pl.BlockSpec((TR, 1), lambda i: (i, 0)),           # distortion
        ),
        out_shape=(jax.ShapeDtypeStruct((3, R_pad), jnp.float32),
                   jax.ShapeDtypeStruct((R_pad, 1), jnp.float32)),
        compiler_params=pltpu.CompilerParams(
            dimension_semantics=("parallel",),
            vmem_limit_bytes=32 * 1024 * 1024),
    )(rgb_res_t, rgb_tgt_t, is_rep, opacity, ws, deltas, ts, tri)

    # ---- finalize the scalar RGB loss from global sums (keeps grid parallel) ----
    is_rep_f = target['is_rep'].astype(jnp.float32)
    n_new = jnp.sum((is_rep_f == 0.0).astype(jnp.float32))
    n_old = jnp.sum((is_rep_f == 1.0).astype(jnp.float32))
    sum_new = jnp.sum(per_ray[0])
    sum_old = jnp.sum(per_ray[1])
    lam_p = jnp.asarray(lambda_p, jnp.float32)
    rgb_loss = sum_new / jnp.maximum(n_new, 1.0) + jnp.where(
        n_old > 0.0, sum_old * lam_p / jnp.maximum(n_old, 1.0), 0.0)

    return {
        'rgb': rgb_loss,
        'opacity': per_ray[2, :R],
        'distortion': dist[:R, 0],
    }


def _reference(results, target, lambda_p, lambda_opacity=0.001, lambda_distortion=0.001):
    """Pure-JAX reference mirroring the PyTorch forward."""
    res_rgb = results['rgb'].astype(jnp.float32)
    tgt_rgb = target['rgb'].astype(jnp.float32)
    is_rep = target['is_rep'].astype(jnp.float32)
    new_mask = (is_rep == 0.0).astype(jnp.float32)[:, None]
    old_mask = (is_rep == 1.0).astype(jnp.float32)[:, None]
    diff = res_rgb - tgt_rgb
    sq = diff ** 2
    n_new = jnp.sum(new_mask)
    n_old = jnp.sum(old_mask)
    loss = jnp.sum(sq * new_mask) / jnp.maximum(n_new, 1.0)
    loss = loss + jnp.where(
        n_old > 0,
        jnp.sum(jnp.sqrt(sq + 0.001 ** 2) * old_mask) * lambda_p / jnp.maximum(n_old, 1.0),
        0.0)
    o = results['opacity'].astype(jnp.float32) + 1e-10
    op = lambda_opacity * (-o * jnp.log(o))
    R = res_rgb.shape[0]
    S = results['ws'].shape[0] // R
    ws = results['ws'].reshape(R, S)
    deltas = results['deltas'].reshape(R, S)
    ts = results['ts'].reshape(R, S)
    wts = ws * ts
    w_excl = jnp.cumsum(ws, axis=1) - ws
    wt_excl = jnp.cumsum(wts, axis=1) - wts
    per = 2.0 * (ts * ws * w_excl - ws * wt_excl) + ws * ws * deltas / 3.0
    dist = lambda_distortion * jnp.sum(per, axis=1)
    return {'rgb': loss, 'opacity': op, 'distortion': dist}


if __name__ == "__main__":
    key = jax.random.PRNGKey(0)
    R, S = 256, 32            # 256 rays, 32 samples per ray (uniform)
    N = R * S

    k = jax.random.split(key, 8)
    results = {
        'rgb': jax.random.uniform(k[0], (R, 3), jnp.float32),
        'opacity': jax.random.uniform(k[1], (R,), jnp.float32, minval=0.05, maxval=0.95),
        'ws': jax.random.uniform(k[2], (N,), jnp.float32, minval=0.0, maxval=0.1),
        'deltas': jax.random.uniform(k[3], (N,), jnp.float32, minval=0.01, maxval=0.1),
        'ts': jnp.cumsum(jax.random.uniform(k[4], (R, S), jnp.float32,
                                            minval=0.01, maxval=0.1), axis=1).reshape(N),
        # rays_a is implied by the uniform layout; built here for completeness
        'rays_a': jnp.stack([jnp.arange(R, dtype=jnp.int32),
                             jnp.arange(R, dtype=jnp.int32) * S,
                             jnp.full((R,), S, dtype=jnp.int32)], axis=1),
    }
    target = {
        'rgb': jax.random.uniform(k[5], (R, 3), jnp.float32),
        'is_rep': jnp.concatenate([jnp.zeros((R // 2,), jnp.int32),
                                   jnp.ones((R - R // 2,), jnp.int32)]),
    }
    lambda_p = 0.5

    # TR=128 -> 2-step grid (exercises the pipelined path at small demo shapes)
    out = meil_nerf_loss(results, target, lambda_p, tile_rays=128)
    out = jax.block_until_ready(out)

    ref = _reference(results, target, lambda_p)
    assert jnp.allclose(out['rgb'], ref['rgb'], atol=1e-5, rtol=1e-4)
    assert jnp.allclose(out['opacity'], ref['opacity'], atol=1e-6, rtol=1e-4)
    assert jnp.allclose(out['distortion'], ref['distortion'], atol=1e-6, rtol=1e-4)

    print("KERNEL_OK")
</pallas_src>

<mosaic_0001>
module attributes {stable_mosaic.version = 11 : i64} {
  func.func @_meil_kernel(%arg0: i32, %arg1: memref<3x128xf32, #tpu.memory_space<vmem>>, %arg2: memref<3x128xf32, #tpu.memory_space<vmem>>, %arg3: memref<1x128xf32, #tpu.memory_space<vmem>>, %arg4: memref<1x128xf32, #tpu.memory_space<vmem>>, %arg5: memref<128x32xf32, #tpu.memory_space<vmem>>, %arg6: memref<128x32xf32, #tpu.memory_space<vmem>>, %arg7: memref<128x32xf32, #tpu.memory_space<vmem>>, %arg8: memref<32x32xf32, #tpu.memory_space<vmem>>, %arg9: memref<3x128xf32, #tpu.memory_space<vmem>>, %arg10: memref<128x1xf32, #tpu.memory_space<vmem>>) attributes {dimension_semantics = [#tpu.dimension_semantics<parallel>], iteration_bounds = array<i64: 2>, scalar_prefetch = 0 : i64, scratch_operands = 0 : i64, tpu.core_type = #tpu.core_type<tc>, window_params = [{transform_indices = @transform_0, window_bounds = array<i64: 3, 128>}, {transform_indices = @transform_1, window_bounds = array<i64: 3, 128>}, {transform_indices = @transform_2, window_bounds = array<i64: 1, 128>}, {transform_indices = @transform_3, window_bounds = array<i64: 1, 128>}, {transform_indices = @transform_4, window_bounds = array<i64: 128, 32>}, {transform_indices = @transform_5, window_bounds = array<i64: 128, 32>}, {transform_indices = @transform_6, window_bounds = array<i64: 128, 32>}, {pipeline_mode = #tpu.pipeline_mode<synchronous>, transform_indices = @transform_7, window_bounds = array<i64: 32, 32>}, {transform_indices = @transform_8, window_bounds = array<i64: 3, 128>}, {transform_indices = @transform_9, window_bounds = array<i64: 128, 1>}]} {
    %c0 = arith.constant 0 : index
    %c0_0 = arith.constant 0 : index
    %0 = vector.load %arg3[%c0, %c0_0] : memref<1x128xf32, #tpu.memory_space<vmem>>, vector<1x128xf32>
    %cst = arith.constant 0.000000e+00 : f32
    %1 = vector.broadcast %cst : f32 to vector<1x128xf32>
    %2 = arith.cmpf oeq, %0, %1 : vector<1x128xf32>
    %3 = arith.extui %2 : vector<1x128xi1> to vector<1x128xi32>
    %4 = arith.sitofp %3 : vector<1x128xi32> to vector<1x128xf32>
    %cst_1 = arith.constant 1.000000e+00 : f32
    %5 = vector.broadcast %cst_1 : f32 to vector<1x128xf32>
    %6 = arith.cmpf oeq, %0, %5 : vector<1x128xf32>
    %7 = arith.extui %6 : vector<1x128xi1> to vector<1x128xi32>
    %8 = arith.sitofp %7 : vector<1x128xi32> to vector<1x128xf32>
    %c0_2 = arith.constant 0 : index
    %c0_3 = arith.constant 0 : index
    %9 = vector.load %arg1[%c0_2, %c0_3] : memref<3x128xf32, #tpu.memory_space<vmem>>, vector<3x128xf32>
    %c0_4 = arith.constant 0 : index
    %c0_5 = arith.constant 0 : index
    %10 = vector.load %arg2[%c0_4, %c0_5] : memref<3x128xf32, #tpu.memory_space<vmem>>, vector<3x128xf32>
    %11 = arith.subf %9, %10 : vector<3x128xf32>
    %12 = arith.mulf %11, %11 : vector<3x128xf32>
    %cst_6 = arith.constant dense<0.000000e+00> : vector<128xf32>
    %13 = vector.multi_reduction <add>, %12, %cst_6 [0] : vector<3x128xf32> to vector<128xf32>
    %14 = vector.shape_cast %13 : vector<128xf32> to vector<1x128xf32>
    %15 = arith.mulf %14, %4 : vector<1x128xf32>
    %cst_7 = arith.constant 9.99999997E-7 : f32
    %16 = vector.broadcast %cst_7 : f32 to vector<3x128xf32>
    %17 = arith.addf %12, %16 : vector<3x128xf32>
    %18 = math.sqrt %17 : vector<3x128xf32>
    %cst_8 = arith.constant dense<0.000000e+00> : vector<128xf32>
    %19 = vector.multi_reduction <add>, %18, %cst_8 [0] : vector<3x128xf32> to vector<128xf32>
    %20 = vector.shape_cast %19 : vector<128xf32> to vector<1x128xf32>
    %21 = arith.mulf %20, %8 : vector<1x128xf32>
    %c0_9 = arith.constant 0 : index
    %c0_10 = arith.constant 0 : index
    %22 = vector.load %arg4[%c0_9, %c0_10] : memref<1x128xf32, #tpu.memory_space<vmem>>, vector<1x128xf32>
    %cst_11 = arith.constant 1.000000e-10 : f32
    %23 = vector.broadcast %cst_11 : f32 to vector<1x128xf32>
    %24 = arith.addf %22, %23 : vector<1x128xf32>
    %cst_12 = arith.constant 0.000000e+00 : f32
    %25 = vector.broadcast %cst_12 : f32 to vector<1x128xf32>
    %26 = arith.subf %25, %24 : vector<1x128xf32>
    %27 = math.log %24 : vector<1x128xf32>
    %28 = arith.mulf %26, %27 : vector<1x128xf32>
    %cst_13 = arith.constant 1.000000e-03 : f32
    %29 = vector.broadcast %cst_13 : f32 to vector<1x128xf32>
    %30 = arith.mulf %29, %28 : vector<1x128xf32>
    %c0_14 = arith.constant 0 : index
    %c0_15 = arith.constant 0 : index
    %31 = vector.load %arg9[%c0_14, %c0_15] : memref<3x128xf32, #tpu.memory_space<vmem>>, vector<1x128xf32>
    tpu.vector_store %arg9[%c0_14, %c0_15], %15 {strides = array<i32>} : memref<3x128xf32, #tpu.memory_space<vmem>>, vector<1x128xf32>,
    %c1 = arith.constant 1 : index
    %c0_16 = arith.constant 0 : index
    %32 = vector.load %arg9[%c1, %c0_16] : memref<3x128xf32, #tpu.memory_space<vmem>>, vector<1x128xf32>
    tpu.vector_store %arg9[%c1, %c0_16], %21 {strides = array<i32>} : memref<3x128xf32, #tpu.memory_space<vmem>>, vector<1x128xf32>,
    %c2 = arith.constant 2 : index
    %c0_17 = arith.constant 0 : index
    %33 = vector.load %arg9[%c2, %c0_17] : memref<3x128xf32, #tpu.memory_space<vmem>>, vector<1x128xf32>
    tpu.vector_store %arg9[%c2, %c0_17], %30 {strides = array<i32>} : memref<3x128xf32, #tpu.memory_space<vmem>>, vector<1x128xf32>,
    %c0_18 = arith.constant 0 : index
    %c0_19 = arith.constant 0 : index
    %34 = vector.load %arg5[%c0_18, %c0_19] : memref<128x32xf32, #tpu.memory_space<vmem>>, vector<128x32xf32>
    %c0_20 = arith.constant 0 : index
    %c0_21 = arith.constant 0 : index
    %35 = vector.load %arg6[%c0_20, %c0_21] : memref<128x32xf32, #tpu.memory_space<vmem>>, vector<128x32xf32>
    %c0_22 = arith.constant 0 : index
    %c0_23 = arith.constant 0 : index
    %36 = vector.load %arg7[%c0_22, %c0_23] : memref<128x32xf32, #tpu.memory_space<vmem>>, vector<128x32xf32>
    %37 = arith.mulf %34, %36 : vector<128x32xf32>
    %c0_24 = arith.constant 0 : index
    %c0_25 = arith.constant 0 : index
    %38 = vector.load %arg8[%c0_24, %c0_25] : memref<32x32xf32, #tpu.memory_space<vmem>>, vector<32x32xf32>
    %cst_26 = arith.constant dense<0.000000e+00> : vector<128x32xf32>
    %39 = tpu.matmul %34, %38, %cst_26 {dimension_numbers = #tpu.dot_dimension_numbers<[1], [0], [0], [1], [0, 0, 1, 1], [], []>} : vector<128x32xf32>, vector<32x32xf32>, vector<128x32xf32> -> vector<128x32xf32>
    %cst_27 = arith.constant dense<0.000000e+00> : vector<128x32xf32>
    %40 = tpu.matmul %37, %38, %cst_27 {dimension_numbers = #tpu.dot_dimension_numbers<[1], [0], [0], [1], [0, 0, 1, 1], [], []>} : vector<128x32xf32>, vector<32x32xf32>, vector<128x32xf32> -> vector<128x32xf32>
    %41 = arith.mulf %37, %39 : vector<128x32xf32>
    %42 = arith.mulf %34, %40 : vector<128x32xf32>
    %43 = arith.subf %41, %42 : vector<128x32xf32>
    %cst_28 = arith.constant 2.000000e+00 : f32
    %44 = vector.broadcast %cst_28 : f32 to vector<128x32xf32>
    %45 = arith.mulf %44, %43 : vector<128x32xf32>
    %46 = arith.mulf %34, %34 : vector<128x32xf32>
    %47 = arith.mulf %46, %35 : vector<128x32xf32>
    %cst_29 = arith.constant 0.333333343 : f32
    %48 = vector.broadcast %cst_29 : f32 to vector<128x32xf32>
    %49 = arith.mulf %48, %47 : vector<128x32xf32>
    %50 = arith.addf %45, %49 : vector<128x32xf32>
    %cst_30 = arith.constant dense<0.000000e+00> : vector<128xf32>
    %51 = vector.multi_reduction <add>, %50, %cst_30 [1] : vector<128x32xf32> to vector<128xf32>
    %52 = vector.shape_cast %51 : vector<128xf32> to vector<128x1xf32>
    %cst_31 = arith.constant 1.000000e-03 : f32
    %53 = vector.broadcast %cst_31 : f32 to vector<128x1xf32>
    %54 = arith.mulf %53, %52 : vector<128x1xf32>
    %c0_32 = arith.constant 0 : index
    %c0_33 = arith.constant 0 : index
    %55 = vector.load %arg10[%c0_32, %c0_33] : memref<128x1xf32, #tpu.memory_space<vmem>>, vector<128x1xf32>
    tpu.vector_store %arg10[%c0_32, %c0_33], %54 {strides = array<i32>} : memref<128x1xf32, #tpu.memory_space<vmem>>, vector<128x1xf32>,
    return
  }
  func.func @transform_0(%arg0: i32) -> (i32, i32) {
    %c0_i32 = arith.constant 0 : i32
    %c0_i32_0 = arith.constant 0 : i32
    return %c0_i32, %arg0 : i32, i32
  }
  func.func @transform_1(%arg0: i32) -> (i32, i32) {
    %c0_i32 = arith.constant 0 : i32
    %c0_i32_0 = arith.constant 0 : i32
    return %c0_i32, %arg0 : i32, i32
  }
  func.func @transform_2(%arg0: i32) -> (i32, i32) {
    %c0_i32 = arith.constant 0 : i32
    %c0_i32_0 = arith.constant 0 : i32
    return %c0_i32, %arg0 : i32, i32
  }
  func.func @transform_3(%arg0: i32) -> (i32, i32) {
    %c0_i32 = arith.constant 0 : i32
    %c0_i32_0 = arith.constant 0 : i32
    return %c0_i32, %arg0 : i32, i32
  }
  func.func @transform_4(%arg0: i32) -> (i32, i32) {
    %c0_i32 = arith.constant 0 : i32
    %c0_i32_0 = arith.constant 0 : i32
    return %arg0, %c0_i32 : i32, i32
  }
  func.func @transform_5(%arg0: i32) -> (i32, i32) {
    %c0_i32 = arith.constant 0 : i32
    %c0_i32_0 = arith.constant 0 : i32
    return %arg0, %c0_i32 : i32, i32
  }
  func.func @transform_6(%arg0: i32) -> (i32, i32) {
    %c0_i32 = arith.constant 0 : i32
    %c0_i32_0 = arith.constant 0 : i32
    return %arg0, %c0_i32 : i32, i32
  }
  func.func @transform_7(%arg0: i32) -> (i32, i32) {
    %c0_i32 = arith.constant 0 : i32
    %c0_i32_0 = arith.constant 0 : i32
    %c0_i32_1 = arith.constant 0 : i32
    return %c0_i32, %c0_i32_0 : i32, i32
  }
  func.func @transform_8(%arg0: i32) -> (i32, i32) {
    %c0_i32 = arith.constant 0 : i32
    %c0_i32_0 = arith.constant 0 : i32
    return %c0_i32, %arg0 : i32, i32
  }
  func.func @transform_9(%arg0: i32) -> (i32, i32) {
    %c0_i32 = arith.constant 0 : i32
    %c0_i32_0 = arith.constant 0 : i32
    return %arg0, %c0_i32 : i32, i32
  }
}

</mosaic_0001>

<llo_original>
// kernel: tpu_custom_call.1
$region0: #{tpu_custom_call.1}
  #allocation0 [shape = 'u32[]', space=smem, size = 0x4, offset = 0x4, fixed_abs, tag = 'smem constant byte address 0x4 - core index']
  #allocation1 [shape = 'u32[144,128]{1,0:T(1,128)}', space=vmem, size = 0x12000, scoped, tag = 'internal scratch']
  %s0 = inlined_call_operand.vmem [shape: f32[3,256], index: 0, kind: input, shape index: {}]
  %s1 = inlined_call_operand.vmem [shape: f32[3,256], index: 1, kind: input, shape index: {}]
  %s2 = inlined_call_operand.vmem [shape: f32[1,256], index: 2, kind: input, shape index: {}]
  %s3 = inlined_call_operand.vmem [shape: f32[1,256], index: 3, kind: input, shape index: {}]
  %s4 = inlined_call_operand.vmem [shape: f32[256,32], index: 4, kind: input, shape index: {}]
  %s5 = inlined_call_operand.vmem [shape: f32[256,32], index: 5, kind: input, shape index: {}]
  %s6 = inlined_call_operand.vmem [shape: f32[256,32], index: 6, kind: input, shape index: {}]
  %s7 = inlined_call_operand.vmem [shape: f32[32,32], index: 7, kind: input, shape index: {}]
  %s8 = inlined_call_operand.hbm [shape: f32[3,256], index: 8, kind: output, shape index: {0}]
  %s9 = inlined_call_operand.vmem [shape: f32[256,1], index: 9, kind: output, shape index: {1}]
  %10 = xla_tuple %s8, %s9
  %s11 = sld [smem:[#allocation0]]
  $region73: #{tpu_custom_call.1} parent=0
    _
  %s13 = ssub.s32 1, %s11
  %s14 = scalar_select 0, %s13, %s11
  $region1: #{tpu_custom_call.1} parent=0
    #allocation2 [shape = 'u8[4096]{0}', space=vmem, size = 0x1000, scoped, tag = 'output window, operand 0']
    #allocation3 [shape = 's32[2]{0}', space=sflag, size = 0x8, scoped, tag = 'scoped memory for tpu_custom_call.1']
    %15 = vsyncpa [#allocation3], 0
    %s16 = scalar_lea.sflag [#allocation3], 1
    %17 = vsyncpa %s16, 0
    loop: start=0, step=1, limit=4
    $region2: #{tpu_custom_call.1} parent=1 // loop_pre_header
      _
    $region3: #{tpu_custom_call.1} parent=1 // loop_header
      %s19 = sphi 0, %s23
      %p20 = scmp.ge.s32.totalorder %s19, 4
      %s29 = sphi 0, %s31
      %s32 = sphi 0, %s29
      %s33 = sphi 0, %s32
      %s49 = sphi 0, %s33
      %s55 = sphi 0, %s57
      %s58 = sphi 0, %s55
      %s59 = sphi 0, %s58
      %s75 = sphi 0, %s59
      %s81 = sphi 0, %s83
      %s84 = sphi 0, %s81
      %s85 = sphi 0, %s84
      %s101 = sphi 0, %s85
      %s107 = sphi 0, %s109
      %s110 = sphi 0, %s107
      %s111 = sphi 0, %s110
      %s127 = sphi 0, %s111
      %s133 = sphi 0, %s135
      %s136 = sphi 0, %s133
      %s137 = sphi 0, %s136
      %s153 = sphi 0, %s137
      %s159 = sphi 0, %s161
      %s162 = sphi 0, %s159
      %s163 = sphi 0, %s162
      %s179 = sphi 0, %s163
      %s185 = sphi 0, %s187
      %s188 = sphi 0, %s185
      %s189 = sphi 0, %s188
      %s205 = sphi 0, %s189
      %s209 = sphi 0, %s209
      %s211 = sphi 0, %s209
      %s212 = sphi 0, %s211
      %s226 = sphi 0, %s212
      %s232 = sphi 0, %s234
      %s235 = sphi 0, %s232
      %s236 = sphi 0, %s235
      %s252 = sphi 0, %s236
      %s258 = sphi 0, %s260
      %s261 = sphi 0, %s258
      %s262 = sphi 0, %s261
      %s278 = sphi 0, %s262
    $region4: #{tpu_custom_call.1} parent=1 // loop_header_branch
      %22 = sbr.rel (%p20) target = $region8
    $region5: #{tpu_custom_call.1} parent=1 // loop_body
      %s24 = ssub.s32 %s19, 1
      %s25 = ssub.s32 %s19, 2
      %s26 = sadd.s32 %s19, 1
      %s27 = ssub.s32 %s19, %s26
      %p28 = scmp.eq.s32.totalorder %s27, 0
      %s30 = sadd.s32 %s29, 1
      %s31 = scalar_select %p28, %s29, %s30
      %p34 = pneg %p28
      %p35 = scmp.eq.s32.totalorder %s19, 1
      %p36 = por %p34, %p35
      %p37 = scmp.ne.s32.totalorder %s29, %s32
      %p38 = scmp.eq.s32.totalorder %s19, 0
      %p39 = por %p37, %p38
      %p40 = scmp.ne.s32.totalorder %s29, %s32
      %p41 = scmp.eq.s32.totalorder %s24, 1
      %p42 = por %p40, %p41
      %p43 = scmp.ne.s32.totalorder %s32, %s33
      %p44 = scmp.eq.s32.totalorder %s24, 0
      %p45 = por %p43, %p44
      %p46 = scmp.ne.s32.totalorder %s32, %s33
      %p47 = scmp.eq.s32.totalorder %s25, 1
      %p48 = por %p46, %p47
      %p50 = scmp.ne.s32.totalorder %s33, %s49
      %p51 = scmp.eq.s32.totalorder %s25, 0
      %p52 = por %p50, %p51
      %s53 = ssub.s32 %s19, %s26
      %p54 = scmp.eq.s32.totalorder %s53, 0
      %s56 = sadd.s32 %s55, 1
      %s57 = scalar_select %p54, %s55, %s56
      %p60 = pneg %p54
      %p61 = scmp.eq.s32.totalorder %s19, 1
      %p62 = por %p60, %p61
      %p63 = scmp.ne.s32.totalorder %s55, %s58
      %p64 = scmp.eq.s32.totalorder %s19, 0
      %p65 = por %p63, %p64
      %p66 = scmp.ne.s32.totalorder %s55, %s58
      %p67 = scmp.eq.s32.totalorder %s24, 1
      %p68 = por %p66, %p67
      %p69 = scmp.ne.s32.totalorder %s58, %s59
      %p70 = scmp.eq.s32.totalorder %s24, 0
      %p71 = por %p69, %p70
      %p72 = scmp.ne.s32.totalorder %s58, %s59
      %p73 = scmp.eq.s32.totalorder %s25, 1
      %p74 = por %p72, %p73
      %p76 = scmp.ne.s32.totalorder %s59, %s75
      %p77 = scmp.eq.s32.totalorder %s25, 0
      %p78 = por %p76, %p77
      %s79 = ssub.s32 %s19, %s26
      %p80 = scmp.eq.s32.totalorder %s79, 0
      %s82 = sadd.s32 %s81, 1
      %s83 = scalar_select %p80, %s81, %s82
      %p86 = pneg %p80
      %p87 = scmp.eq.s32.totalorder %s19, 1
      %p88 = por %p86, %p87
      %p89 = scmp.ne.s32.totalorder %s81, %s84
      %p90 = scmp.eq.s32.totalorder %s19, 0
      %p91 = por %p89, %p90
      %p92 = scmp.ne.s32.totalorder %s81, %s84
      %p93 = scmp.eq.s32.totalorder %s24, 1
      %p94 = por %p92, %p93
      %p95 = scmp.ne.s32.totalorder %s84, %s85
      %p96 = scmp.eq.s32.totalorder %s24, 0
      %p97 = por %p95, %p96
      %p98 = scmp.ne.s32.totalorder %s84, %s85
      %p99 = scmp.eq.s32.totalorder %s25, 1
      %p100 = por %p98, %p99
      %p102 = scmp.ne.s32.totalorder %s85, %s101
      %p103 = scmp.eq.s32.totalorder %s25, 0
      %p104 = por %p102, %p103
      %s105 = ssub.s32 %s19, %s26
      %p106 = scmp.eq.s32.totalorder %s105, 0
      %s108 = sadd.s32 %s107, 1
      %s109 = scalar_select %p106, %s107, %s108
      %p112 = pneg %p106
      %p113 = scmp.eq.s32.totalorder %s19, 1
      %p114 = por %p112, %p113
      %p115 = scmp.ne.s32.totalorder %s107, %s110
      %p116 = scmp.eq.s32.totalorder %s19, 0
      %p117 = por %p115, %p116
      %p118 = scmp.ne.s32.totalorder %s107, %s110
      %p119 = scmp.eq.s32.totalorder %s24, 1
      %p120 = por %p118, %p119
      %p121 = scmp.ne.s32.totalorder %s110, %s111
      %p122 = scmp.eq.s32.totalorder %s24, 0
      %p123 = por %p121, %p122
      %p124 = scmp.ne.s32.totalorder %s110, %s111
      %p125 = scmp.eq.s32.totalorder %s25, 1
      %p126 = por %p124, %p125
      %p128 = scmp.ne.s32.totalorder %s111, %s127
      %p129 = scmp.eq.s32.totalorder %s25, 0
      %p130 = por %p128, %p129
      %s131 = ssub.s32 %s19, %s26
      %p132 = scmp.eq.s32.totalorder %s131, 0
      %s134 = sadd.s32 %s133, 1
      %s135 = scalar_select %p132, %s133, %s134
      %p138 = pneg %p132
      %p139 = scmp.eq.s32.totalorder %s19, 1
      %p140 = por %p138, %p139
      %p141 = scmp.ne.s32.totalorder %s133, %s136
      %p142 = scmp.eq.s32.totalorder %s19, 0
      %p143 = por %p141, %p142
      %p144 = scmp.ne.s32.totalorder %s133, %s136
      %p145 = scmp.eq.s32.totalorder %s24, 1
      %p146 = por %p144, %p145
      %p147 = scmp.ne.s32.totalorder %s136, %s137
      %p148 = scmp.eq.s32.totalorder %s24, 0
      %p149 = por %p147, %p148
      %p150 = scmp.ne.s32.totalorder %s136, %s137
      %p151 = scmp.eq.s32.totalorder %s25, 1
      %p152 = por %p150, %p151
      %p154 = scmp.ne.s32.totalorder %s137, %s153
      %p155 = scmp.eq.s32.totalorder %s25, 0
      %p156 = por %p154, %p155
      %s157 = ssub.s32 %s19, %s26
      %p158 = scmp.eq.s32.totalorder %s157, 0
      %s160 = sadd.s32 %s159, 1
      %s161 = scalar_select %p158, %s159, %s160
      %p164 = pneg %p158
      %p165 = scmp.eq.s32.totalorder %s19, 1
      %p166 = por %p164, %p165
      %p167 = scmp.ne.s32.totalorder %s159, %s162
      %p168 = scmp.eq.s32.totalorder %s19, 0
      %p169 = por %p167, %p168
      %p170 = scmp.ne.s32.totalorder %s159, %s162
      %p171 = scmp.eq.s32.totalorder %s24, 1
      %p172 = por %p170, %p171
      %p173 = scmp.ne.s32.totalorder %s162, %s163
      %p174 = scmp.eq.s32.totalorder %s24, 0
      %p175 = por %p173, %p174
      %p176 = scmp.ne.s32.totalorder %s162, %s163
      %p177 = scmp.eq.s32.totalorder %s25, 1
      %p178 = por %p176, %p177
      %p180 = scmp.ne.s32.totalorder %s163, %s179
      %p181 = scmp.eq.s32.totalorder %s25, 0
      %p182 = por %p180, %p181
      %s183 = ssub.s32 %s19, %s26
      %p184 = scmp.eq.s32.totalorder %s183, 0
      %s186 = sadd.s32 %s185, 1
      %s187 = scalar_select %p184, %s185, %s186
      %p190 = pneg %p184
      %p191 = scmp.eq.s32.totalorder %s19, 1
      %p192 = por %p190, %p191
      %p193 = scmp.ne.s32.totalorder %s185, %s188
      %p194 = scmp.eq.s32.totalorder %s19, 0
      %p195 = por %p193, %p194
      %p196 = scmp.ne.s32.totalorder %s185, %s188
      %p197 = scmp.eq.s32.totalorder %s24, 1
      %p198 = por %p196, %p197
      %p199 = scmp.ne.s32.totalorder %s188, %s189
      %p200 = scmp.eq.s32.totalorder %s24, 0
      %p201 = por %p199, %p200
      %p202 = scmp.ne.s32.totalorder %s188, %s189
      %p203 = scmp.eq.s32.totalorder %s25, 1
      %p204 = por %p202, %p203
      %p206 = scmp.ne.s32.totalorder %s189, %s205
      %p207 = scmp.eq.s32.totalorder %s25, 0
      %p208 = por %p206, %p207
      %s210 = sadd.s32 %s209, 1
      %p213 = scmp.eq.s32.totalorder %s19, 1
      %p214 = scmp.ne.s32.totalorder %s209, %s211
      %p215 = scmp.eq.s32.totalorder %s19, 0
      %p216 = por %p214, %p215
      %p217 = scmp.ne.s32.totalorder %s209, %s211
      %p218 = scmp.eq.s32.totalorder %s24, 1
      %p219 = por %p217, %p218
      %p220 = scmp.ne.s32.totalorder %s211, %s212
      %p221 = scmp.eq.s32.totalorder %s24, 0
      %p222 = por %p220, %p221
      %p223 = scmp.ne.s32.totalorder %s211, %s212
      %p224 = scmp.eq.s32.totalorder %s25, 1
      %p225 = por %p223, %p224
      %p227 = scmp.ne.s32.totalorder %s212, %s226
      %p228 = scmp.eq.s32.totalorder %s25, 0
      %p229 = por %p227, %p228
      %s230 = ssub.s32 %s19, %s26
      %p231 = scmp.eq.s32.totalorder %s230, 0
      %s233 = sadd.s32 %s232, 1
      %s234 = scalar_select %p231, %s232, %s233
      %p237 = pneg %p231
      %p238 = scmp.eq.s32.totalorder %s19, 1
      %p239 = por %p237, %p238
      %p240 = scmp.ne.s32.totalorder %s232, %s235
      %p241 = scmp.eq.s32.totalorder %s19, 0
      %p242 = por %p240, %p241
      %p243 = scmp.ne.s32.totalorder %s232, %s235
      %p244 = scmp.eq.s32.totalorder %s24, 1
      %p245 = por %p243, %p244
      %p246 = scmp.ne.s32.totalorder %s235, %s236
      %p247 = scmp.eq.s32.totalorder %s24, 0
      %p248 = por %p246, %p247
      %p249 = scmp.ne.s32.totalorder %s235, %s236
      %p250 = scmp.eq.s32.totalorder %s25, 1
      %p251 = por %p249, %p250
      %p253 = scmp.ne.s32.totalorder %s236, %s252
      %p254 = scmp.eq.s32.totalorder %s25, 0
      %p255 = por %p253, %p254
      %s256 = ssub.s32 %s19, %s26
      %p257 = scmp.eq.s32.totalorder %s256, 0
      %s259 = sadd.s32 %s258, 1
      %s260 = scalar_select %p257, %s258, %s259
      %p263 = pneg %p257
      %p264 = scmp.eq.s32.totalorder %s19, 1
      %p265 = por %p263, %p264
      %p266 = scmp.ne.s32.totalorder %s258, %s261
      %p267 = scmp.eq.s32.totalorder %s19, 0
      %p268 = por %p266, %p267
      %p269 = scmp.ne.s32.totalorder %s258, %s261
      %p270 = scmp.eq.s32.totalorder %s24, 1
      %p271 = por %p269, %p270
      %p272 = scmp.ne.s32.totalorder %s261, %s262
      %p273 = scmp.eq.s32.totalorder %s24, 0
      %p274 = por %p272, %p273
      %p275 = scmp.ne.s32.totalorder %s261, %s262
      %p276 = scmp.eq.s32.totalorder %s25, 1
      %p277 = por %p275, %p276
      %p279 = scmp.ne.s32.totalorder %s262, %s278
      %p280 = scmp.eq.s32.totalorder %s25, 0
      %p281 = por %p279, %p280
      %p282 = scmp.le.s32.totalorder 1, %s19
      %p283 = scmp.lt.s32.totalorder %s19, 3
      %p284 = pnand %p282, %p283
      %p285 = pneg %p284
      // Predicated region
      $region9: #{tpu_custom_call.1} parent=5 // pred_check
        _
      $region10: #{tpu_custom_call.1} parent=5 // pred_check_branch
        %287 = sbr.rel (%p284) target = $region12
      $region11: #{tpu_custom_call.1} parent=5 // pred_region
        %s288 = ssub.s32 %s19, 1
        // Predicated region
        $region13: #{tpu_custom_call.1} parent=11 // pred_check
          %p289 = pneg %p222
        $region14: #{tpu_custom_call.1} parent=11 // pred_check_branch
          %291 = sbr.rel (%p289) target = $region16
        $region15: #{tpu_custom_call.1} parent=11 // pred_region
          _
        $region16: #{tpu_custom_call.1} parent=11 // pred_fallthru
          _
      $region12: #{tpu_custom_call.1} parent=5 // pred_fallthru
        _
      %p292 = scmp.lt.s32.totalorder %s19, 2
      // Predicated region
      $region17: #{tpu_custom_call.1} parent=5 // pred_check
        %p293 = pneg %p292
      $region18: #{tpu_custom_call.1} parent=5 // pred_check_branch
        %295 = sbr.rel (%p293) target = $region20
      $region19: #{tpu_custom_call.1} parent=5 // pred_region
        // Predicated region
        $region21: #{tpu_custom_call.1} parent=19 // pred_check
          %p296 = pneg %p39
        $region22: #{tpu_custom_call.1} parent=19 // pred_check_branch
          %298 = sbr.rel (%p296) target = $region24
        $region23: #{tpu_custom_call.1} parent=19 // pred_region
          %p299 = scmp.lt.s32.totalorder %s19, 1
          %s300 = scalar_select %p299, %s19, 1
          %s301 = smul.addr %s300, 4
          %s302 = scalar_lea.vmem %s0, %s301
        $region24: #{tpu_custom_call.1} parent=19 // pred_fallthru
          _
        // Predicated region
        $region25: #{tpu_custom_call.1} parent=19 // pred_check
          %p303 = pneg %p65
        $region26: #{tpu_custom_call.1} parent=19 // pred_check_branch
          %305 = sbr.rel (%p303) target = $region28
        $region27: #{tpu_custom_call.1} parent=19 // pred_region
          %p306 = scmp.lt.s32.totalorder %s19, 1
          %s307 = scalar_select %p306, %s19, 1
          %s308 = smul.addr %s307, 4
          %s309 = scalar_lea.vmem %s1, %s308
        $region28: #{tpu_custom_call.1} parent=19 // pred_fallthru
          _
        // Predicated region
        $region29: #{tpu_custom_call.1} parent=19 // pred_check
          %p310 = pneg %p91
        $region30: #{tpu_custom_call.1} parent=19 // pred_check_branch
          %312 = sbr.rel (%p310) target = $region32
        $region31: #{tpu_custom_call.1} parent=19 // pred_region
          %p313 = scmp.lt.s32.totalorder %s19, 1
          %s314 = scalar_select %p313, %s19, 1
          %s315 = scalar_lea.vmem %s2, %s314
        $region32: #{tpu_custom_call.1} parent=19 // pred_fallthru
          _
        // Predicated region
        $region33: #{tpu_custom_call.1} parent=19 // pred_check
          %p316 = pneg %p117
        $region34: #{tpu_custom_call.1} parent=19 // pred_check_branch
          %318 = sbr.rel (%p316) target = $region36
        $region35: #{tpu_custom_call.1} parent=19 // pred_region
          %p319 = scmp.lt.s32.totalorder %s19, 1
          %s320 = scalar_select %p319, %s19, 1
          %s321 = scalar_lea.vmem %s3, %s320
        $region36: #{tpu_custom_call.1} parent=19 // pred_fallthru
          _
        // Predicated region
        $region37: #{tpu_custom_call.1} parent=19 // pred_check
          %p322 = pneg %p143
        $region38: #{tpu_custom_call.1} parent=19 // pred_check_branch
          %324 = sbr.rel (%p322) target = $region40
        $region39: #{tpu_custom_call.1} parent=19 // pred_region
          %s325 = smul.u32 16, %s19
          %p326 = scmp.lt.s32.totalorder %s325, 31
          %s327 = scalar_select %p326, %s325, 31
          %s328 = smul.addr %s327, 8
          %s329 = scalar_lea.vmem %s4, %s328
          %s330 = smul.u32 16, %s19
        $region40: #{tpu_custom_call.1} parent=19 // pred_fallthru
          _
        // Predicated region
        $region41: #{tpu_custom_call.1} parent=19 // pred_check
          %p331 = pneg %p169
        $region42: #{tpu_custom_call.1} parent=19 // pred_check_branch
          %333 = sbr.rel (%p331) target = $region44
        $region43: #{tpu_custom_call.1} parent=19 // pred_region
          %s334 = smul.u32 16, %s19
          %p335 = scmp.lt.s32.totalorder %s334, 31
          %s336 = scalar_select %p335, %s334, 31
          %s337 = smul.addr %s336, 8
          %s338 = scalar_lea.vmem %s5, %s337
          %s339 = smul.u32 16, %s19
        $region44: #{tpu_custom_call.1} parent=19 // pred_fallthru
          _
        // Predicated region
        $region45: #{tpu_custom_call.1} parent=19 // pred_check
          %p340 = pneg %p195
        $region46: #{tpu_custom_call.1} parent=19 // pred_check_branch
          %342 = sbr.rel (%p340) target = $region48
        $region47: #{tpu_custom_call.1} parent=19 // pred_region
          %s343 = smul.u32 16, %s19
          %p344 = scmp.lt.s32.totalorder %s343, 31
          %s345 = scalar_select %p344, %s343, 31
          %s346 = smul.addr %s345, 8
          %s347 = scalar_lea.vmem %s6, %s346
          %s348 = smul.u32 16, %s19
        $region48: #{tpu_custom_call.1} parent=19 // pred_fallthru
          _
      $region20: #{tpu_custom_call.1} parent=5 // pred_fallthru
        _
      %p349 = scmp.le.s32.totalorder 1, %s19
      %p350 = scmp.lt.s32.totalorder %s19, 3
      %p351 = pnand %p349, %p350
      %p352 = pneg %p351
      // Predicated region
      $region49: #{tpu_custom_call.1} parent=5 // pred_check
        _
      $region50: #{tpu_custom_call.1} parent=5 // pred_check_branch
        %354 = sbr.rel (%p351) target = $region52
      $region51: #{tpu_custom_call.1} parent=5 // pred_region
        %s355 = ssub.s32 %s19, 1
        %p356 = scmp.lt.s32.totalorder %s24, 1
        %s357 = scalar_select %p356, %s24, 1
        %s358 = smul.addr %s357, 4
        %s359 = scalar_lea.vmem %s0, %s358
        %p360 = pneg %p45
        %p361 = pneg %p42
        %p362 = scmp.lt.s32.totalorder %s24, 1
        %s363 = scalar_select %p362, %s24, 1
        %s364 = smul.addr %s363, 4
        %s365 = scalar_lea.vmem %s1, %s364
        %p366 = pneg %p71
        %p367 = pneg %p68
        %p368 = scmp.lt.s32.totalorder %s24, 1
        %s369 = scalar_select %p368, %s24, 1
        %s370 = scalar_lea.vmem %s2, %s369
        %p371 = pneg %p97
        %p372 = pneg %p94
        %p373 = scmp.lt.s32.totalorder %s24, 1
        %s374 = scalar_select %p373, %s24, 1
        %s375 = scalar_lea.vmem %s3, %s374
        %p376 = pneg %p123
        %p377 = pneg %p120
        %s378 = smul.u32 16, %s24
        %p379 = scmp.lt.s32.totalorder %s378, 31
        %s380 = scalar_select %p379, %s378, 31
        %s381 = smul.addr %s380, 8
        %s382 = scalar_lea.vmem %s4, %s381
        %p383 = pneg %p149
        %p384 = pneg %p146
        %s385 = smul.u32 16, %s24
        %p386 = scmp.lt.s32.totalorder %s385, 31
        %s387 = scalar_select %p386, %s385, 31
        %s388 = smul.addr %s387, 8
        %s389 = scalar_lea.vmem %s5, %s388
        %p390 = pneg %p175
        %p391 = pneg %p172
        %s392 = smul.u32 16, %s24
        %p393 = scmp.lt.s32.totalorder %s392, 31
        %s394 = scalar_select %p393, %s392, 31
        %s395 = smul.addr %s394, 8
        %s396 = scalar_lea.vmem %s6, %s395
        %p397 = pneg %p201
        %p398 = pneg %p198
        %p399 = pneg %p222
        %p400 = pneg %p219
        %p401 = pneg %p248
        %p402 = pneg %p245
        %s403 = sand.u32 %s235, 1
        %s404 = scalar_lea.sflag [#allocation3], %s403
        %s405 = sand.u32 %s235, 1
        %s406 = smul.addr %s405, 4
        %s407 = scalar_lea.vmem [#allocation2], %s406
        %p408 = pneg %p274
        %p409 = pneg %p271
        %s410 = smul.u32 16, %s24
        %p411 = scmp.lt.s32.totalorder %s410, 31
        %s412 = scalar_select %p411, %s410, 31
        %s413 = smul.addr %s412, 8
        %s414 = scalar_lea.vmem %s9, %s413
        %p415 = scmp.lt.s32.totalorder %s24, 1
        %s416 = scalar_select %p415, %s24, 1
        %s417 = smul.addr %s416, 4
        %s418 = scalar_lea.vmem %s0, %s417
        %p419 = scmp.lt.s32.totalorder %s24, 1
        %s420 = scalar_select %p419, %s24, 1
        %s421 = smul.addr %s420, 4
        %s422 = scalar_lea.vmem %s1, %s421
        %p423 = scmp.lt.s32.totalorder %s24, 1
        %s424 = scalar_select %p423, %s24, 1
        %s425 = scalar_lea.vmem %s2, %s424
        %p426 = scmp.lt.s32.totalorder %s24, 1
        %s427 = scalar_select %p426, %s24, 1
        %s428 = scalar_lea.vmem %s3, %s427
        %s429 = smul.u32 16, %s24
        %p430 = scmp.lt.s32.totalorder %s429, 31
        %s431 = scalar_select %p430, %s429, 31
        %s432 = smul.addr %s431, 8
        %s433 = scalar_lea.vmem %s4, %s432
        %s434 = smul.u32 16, %s24
        %s435 = smul.u32 16, %s24
        %p436 = scmp.lt.s32.totalorder %s435, 31
        %s437 = scalar_select %p436, %s435, 31
        %s438 = smul.addr %s437, 8
        %s439 = scalar_lea.vmem %s5, %s438
        %s440 = smul.u32 16, %s24
        %s441 = smul.u32 16, %s24
        %p442 = scmp.lt.s32.totalorder %s441, 31
        %s443 = scalar_select %p442, %s441, 31
        %s444 = smul.addr %s443, 8
        %s445 = scalar_lea.vmem %s6, %s444
        %s446 = smul.u32 16, %s24
        %s447 = smul.u32 16, %s24
        %p448 = scmp.lt.s32.totalorder %s447, 31
        %s449 = scalar_select %p448, %s447, 31
        %s450 = smul.addr %s449, 8
        %s451 = scalar_lea.vmem %s9, %s450
        %s452 = smul.u32 16, %s24
        %v453 = vld [vmem:[%s425] sm:$0x1]
        %vm454 = vcmp.eq.f32.partialorder %v453, 0.0
        %v455 = vsel %vm454, 1, 0
        %v456 = vcvt.s32.f32 %v455
        %vm457 = vcmp.eq.f32.partialorder %v453, 1.0
        %v458 = vsel %vm457, 1, 0
        %v459 = vcvt.s32.f32 %v458
        %v460 = vld [vmem:[%s418] sm:$0x7]
        %v461 = vld [vmem:[%s422] sm:$0x7]
        %v462 = vsub.f32 %v460, %v461
        %v463 = vmul.f32 %v462, %v462
        %vm464 = vcmask 1042432
        %v465 = vsel %vm464, %v463, 0.0
        %v466 = vrot.slane %v465, 4
        %v467 = vadd.f32 %v465, %v466
        %v468 = vrot.slane %v467, 2
        %v469 = vadd.f32 %v467, %v468
        %v470 = vrot.slane %v469, 1
        %v471 = vadd.f32 %v469, %v470
        %v472 = vmul.f32 %v471, %v456
        %v473 = vadd.f32 %v463, 1e-06
        %v474 = vrsqrt.pop %v473
        %v475 = vmul.f32 %v473, %v474
        %vm476 = vcmp.eq.f32.partialorder %v473, inf
        %v477 = vsel %vm476, %v473, %v475
        %vm478 = vcmp.eq.f32.partialorder %v473, 0.0
        %v479 = vand.u32 %v473, 2147483648
        %v480 = vsel %vm478, %v479, %v477
        %v481 = vsel %vm464, %v480, 0.0
        %v482 = vrot.slane %v481, 4
        %v483 = vadd.f32 %v481, %v482
        %v484 = vrot.slane %v483, 2
        %v485 = vadd.f32 %v483, %v484
        %v486 = vrot.slane %v485, 1
        %v487 = vadd.f32 %v485, %v486
        %v488 = vmul.f32 %v487, %v459
        %v489 = vld [vmem:[%s428] sm:$0x1]
        %v490 = vadd.f32 %v489, 1e-10
        %v491 = vsub.f32 0.0, %v490
        %v492 = vlog2.pop %v490
        %v493 = vmul.f32 %v492, 0.6931472
        %v494 = vmul.f32 %v491, %v493
        %v495 = vmul.f32 %v494, 0.001
        %496 = vst [vmem:[%s407] sm:$0x1] %v472
        %497 = vst [vmem:[%s407 + $0x1] sm:$0x1] %v488
        %498 = vst [vmem:[%s407 + $0x2] sm:$0x1] %v495
        %v499 = vld [vmem:[%s433] sm:$0xff]
        %v500 = vld [vmem:[%s433 + $0x8] sm:$0xff]
        %v501 = vld [vmem:[%s433 + $0x10] sm:$0xff]
        %v502 = vld [vmem:[%s433 + $0x18] sm:$0xff]
        %v503 = vld [vmem:[%s433 + $0x20] sm:$0xff]
        %v504 = vld [vmem:[%s433 + $0x28] sm:$0xff]
        %v505 = vld [vmem:[%s433 + $0x30] sm:$0xff]
        %v506 = vld [vmem:[%s433 + $0x38] sm:$0xff]
        %v507 = vld [vmem:[%s433 + $0x40] sm:$0xff]
        %v508 = vld [vmem:[%s433 + $0x48] sm:$0xff]
        %v509 = vld [vmem:[%s433 + $0x50] sm:$0xff]
        %v510 = vld [vmem:[%s433 + $0x58] sm:$0xff]
        %v511 = vld [vmem:[%s433 + $0x60] sm:$0xff]
        %v512 = vld [vmem:[%s433 + $0x68] sm:$0xff]
        %v513 = vld [vmem:[%s433 + $0x70] sm:$0xff]
        %v514 = vld [vmem:[%s433 + $0x78] sm:$0xff]
        %v515 = vld [vmem:[%s439] sm:$0xff]
        %v516 = vld [vmem:[%s439 + $0x8] sm:$0xff]
        %v517 = vld [vmem:[%s439 + $0x10] sm:$0xff]
        %v518 = vld [vmem:[%s439 + $0x18] sm:$0xff]
        %v519 = vld [vmem:[%s439 + $0x20] sm:$0xff]
        %v520 = vld [vmem:[%s439 + $0x28] sm:$0xff]
        %v521 = vld [vmem:[%s439 + $0x30] sm:$0xff]
        %v522 = vld [vmem:[%s439 + $0x38] sm:$0xff]
        %v523 = vld [vmem:[%s439 + $0x40] sm:$0xff]
        %v524 = vld [vmem:[%s439 + $0x48] sm:$0xff]
        %v525 = vld [vmem:[%s439 + $0x50] sm:$0xff]
        %v526 = vld [vmem:[%s439 + $0x58] sm:$0xff]
        %v527 = vld [vmem:[%s439 + $0x60] sm:$0xff]
        %v528 = vld [vmem:[%s439 + $0x68] sm:$0xff]
        %v529 = vld [vmem:[%s439 + $0x70] sm:$0xff]
        %v530 = vld [vmem:[%s439 + $0x78] sm:$0xff]
        %v531 = vld [vmem:[%s445] sm:$0xff]
        %v532 = vld [vmem:[%s445 + $0x8] sm:$0xff]
        %v533 = vld [vmem:[%s445 + $0x10] sm:$0xff]
        %v534 = vld [vmem:[%s445 + $0x18] sm:$0xff]
        %v535 = vld [vmem:[%s445 + $0x20] sm:$0xff]
        %v536 = vld [vmem:[%s445 + $0x28] sm:$0xff]
        %v537 = vld [vmem:[%s445 + $0x30] sm:$0xff]
        %v538 = vld [vmem:[%s445 + $0x38] sm:$0xff]
        %v539 = vld [vmem:[%s445 + $0x40] sm:$0xff]
        %v540 = vld [vmem:[%s445 + $0x48] sm:$0xff]
        %v541 = vld [vmem:[%s445 + $0x50] sm:$0xff]
        %v542 = vld [vmem:[%s445 + $0x58] sm:$0xff]
        %v543 = vld [vmem:[%s445 + $0x60] sm:$0xff]
        %v544 = vld [vmem:[%s445 + $0x68] sm:$0xff]
        %v545 = vld [vmem:[%s445 + $0x70] sm:$0xff]
        %v546 = vld [vmem:[%s445 + $0x78] sm:$0xff]
        %v547 = vmul.f32 %v499, %v531
        %v548 = vmul.f32 %v500, %v532
        %v549 = vmul.f32 %v501, %v533
        %v550 = vmul.f32 %v502, %v534
        %v551 = vmul.f32 %v503, %v535
        %v552 = vmul.f32 %v504, %v536
        %v553 = vmul.f32 %v505, %v537
        %v554 = vmul.f32 %v506, %v538
        %v555 = vmul.f32 %v507, %v539
        %v556 = vmul.f32 %v508, %v540
        %v557 = vmul.f32 %v509, %v541
        %v558 = vmul.f32 %v510, %v542
        %v559 = vmul.f32 %v511, %v543
        %v560 = vmul.f32 %v512, %v544
        %v561 = vmul.f32 %v513, %v545
        %v562 = vmul.f32 %v514, %v546
        %v563 = vld [vmem:[%s7] sm:$0xff]
        %v564 = vld [vmem:[%s7 + $0x8] sm:$0xff]
        %v565 = vld [vmem:[%s7 + $0x10] sm:$0xff]
        %v566 = vld [vmem:[%s7 + $0x18] sm:$0xff]
        %vm567 = vcmask 261120
        %v569 = vsel %vm567, %v499, 0
        %v572 = vsel %vm567, %v500, 0
        %v575 = vsel %vm567, %v501, 0
        %v578 = vsel %vm567, %v502, 0
        %v581 = vsel %vm567, %v503, 0
        %v584 = vsel %vm567, %v504, 0
        %v587 = vsel %vm567, %v505, 0
        %v590 = vsel %vm567, %v506, 0
        %v593 = vsel %vm567, %v507, 0
        %v596 = vsel %vm567, %v508, 0
        %v599 = vsel %vm567, %v509, 0
        %v602 = vsel %vm567, %v510, 0
        %v605 = vsel %vm567, %v511, 0
        %v608 = vsel %vm567, %v512, 0
        %v611 = vsel %vm567, %v513, 0
        %v614 = vsel %vm567, %v514, 0
        %616 = vmatprep.subr.mxu0 0.0
        %617 = vmatpush1.msra.mxu0 0.0
        %618 = vmatprep.subr.mxu0 0.0
        %619 = vmatpush1.msra.mxu0 0.0
        %620 = vmatprep.subr.mxu0 0.0
        %621 = vmatpush1.msra.mxu0 0.0
        %622 = vmatprep.subr.mxu0 0.0
        %623 = vmatpush1.msra.mxu0 0.0
        %624 = vmatprep.subr.mxu0 0.0
        %625 = vmatpush1.msra.mxu0 0.0
        %626 = vmatprep.subr.mxu0 0.0
        %627 = vmatpush1.msra.mxu0 0.0
        %628 = vmatprep.subr.mxu0 0.0
        %629 = vmatpush1.msra.mxu0 0.0
        %630 = vmatprep.subr.mxu0 0.0
        %631 = vmatpush1.msra.mxu0 0.0
        %632 = vmatprep.subr.mxu0 0.0
        %633 = vmatpush1.msra.mxu0 0.0
        %634 = vmatprep.subr.mxu0 0.0
        %635 = vmatpush1.msra.mxu0 0.0
        %636 = vmatprep.subr.mxu0 0.0
        %637 = vmatpush1.msra.mxu0 0.0
        %638 = vmatprep.subr.mxu0 0.0
        %639 = vmatpush1.msra.mxu0 0.0
        %640 = vmatprep.subr.mxu0 0.0
        %641 = vmatpush1.msra.mxu0 %v566
        %642 = vmatprep.subr.mxu0 0.0
        %643 = vmatpush1.msra.mxu0 %v565
        %644 = vmatprep.subr.mxu0 0.0
        %645 = vmatpush1.msra.mxu0 %v564
        %646 = vmatprep.subr.mxu0 0.0
        %647 = vmatpush1.msra.mxu0 %v563
        %648 = vmatprep.subr.mxu0 0.0
        %649 = vmatpush2.msra.mxu0 0.0
        %650 = vmatprep.subr.mxu0 0.0
        %651 = vmatpush2.msra.mxu0 0.0
        %652 = vmatprep.subr.mxu0 0.0
        %653 = vmatpush2.msra.mxu0 0.0
        %654 = vmatprep.subr.mxu0 0.0
        %655 = vmatpush2.msra.mxu0 0.0
        %656 = vmatprep.subr.mxu0 0.0
        %657 = vmatpush2.msra.mxu0 0.0
        %658 = vmatprep.subr.mxu0 0.0
        %659 = vmatpush2.msra.mxu0 0.0
        %660 = vmatprep.subr.mxu0 0.0
        %661 = vmatpush2.msra.mxu0 0.0
        %662 = vmatprep.subr.mxu0 0.0
        %663 = vmatpush2.msra.mxu0 0.0
        %664 = vmatprep.subr.mxu0 0.0
        %665 = vmatpush2.msra.mxu0 0.0
        %666 = vmatprep.subr.mxu0 0.0
        %667 = vmatpush2.msra.mxu0 0.0
        %668 = vmatprep.subr.mxu0 0.0
        %669 = vmatpush2.msra.mxu0 0.0
        %670 = vmatprep.subr.mxu0 0.0
        %671 = vmatpush2.msra.mxu0 0.0
        %672 = vmatprep.subr.mxu0 0.0
        %673 = vmatpush2.msra.mxu0 0.0
        %674 = vmatprep.subr.mxu0 0.0
        %675 = vmatpush2.msra.mxu0 0.0
        %676 = vmatprep.subr.mxu0 0.0
        %677 = vmatpush2.msra.mxu0 0.0
        %678 = vmatprep.subr.mxu0 0.0
        %679 = vmatpush2.msra.mxu0 0.0
        %680 = vmatprep.mubr.f32.mxu0 0.0
        %681 = vmatmul.mubr.f32.gmra.mxu0 %v569
        %v682 = vpop.f32.mrf.mxu0
        %v683 = vadd.f32 0.0, %v682
        %v684 = vpop.f32.mrf.mxu0
        %685 = vmatprep.mubr.f32.mxu0 0.0
        %686 = vmatmul.mubr.f32.gmra.mxu0 %v572
        %v687 = vpop.f32.mrf.mxu0
        %v688 = vadd.f32 0.0, %v687
        %v689 = vpop.f32.mrf.mxu0
        %690 = vmatprep.mubr.f32.mxu0 0.0
        %691 = vmatmul.mubr.f32.gmra.mxu0 %v575
        %v692 = vpop.f32.mrf.mxu0
        %v693 = vadd.f32 0.0, %v692
        %v694 = vpop.f32.mrf.mxu0
        %695 = vmatprep.mubr.f32.mxu0 0.0
        %696 = vmatmul.mubr.f32.gmra.mxu0 %v578
        %v697 = vpop.f32.mrf.mxu0
        %v698 = vadd.f32 0.0, %v697
        %v699 = vpop.f32.mrf.mxu0
        %700 = vmatprep.mubr.f32.mxu0 0.0
        %701 = vmatmul.mubr.f32.gmra.mxu0 %v581
        %v702 = vpop.f32.mrf.mxu0
        %v703 = vadd.f32 0.0, %v702
        %v704 = vpop.f32.mrf.mxu0
        %705 = vmatprep.mubr.f32.mxu0 0.0
        %706 = vmatmul.mubr.f32.gmra.mxu0 %v584
        %v707 = vpop.f32.mrf.mxu0
        %v708 = vadd.f32 0.0, %v707
        %v709 = vpop.f32.mrf.mxu0
        %710 = vmatprep.mubr.f32.mxu0 0.0
        %711 = vmatmul.mubr.f32.gmra.mxu0 %v587
        %v712 = vpop.f32.mrf.mxu0
        %v713 = vadd.f32 0.0, %v712
        %v714 = vpop.f32.mrf.mxu0
        %715 = vmatprep.mubr.f32.mxu0 0.0
        %716 = vmatmul.mubr.f32.gmra.mxu0 %v590
        %v717 = vpop.f32.mrf.mxu0
        %v718 = vadd.f32 0.0, %v717
        %v719 = vpop.f32.mrf.mxu0
        %720 = vmatprep.mubr.f32.mxu0 0.0
        %721 = vmatmul.mubr.f32.gmra.mxu0 %v593
        %v722 = vpop.f32.mrf.mxu0
        %v723 = vadd.f32 0.0, %v722
        %v724 = vpop.f32.mrf.mxu0
        %725 = vmatprep.mubr.f32.mxu0 0.0
        %726 = vmatmul.mubr.f32.gmra.mxu0 %v596
        %v727 = vpop.f32.mrf.mxu0
        %v728 = vadd.f32 0.0, %v727
        %v729 = vpop.f32.mrf.mxu0
        %730 = vmatprep.mubr.f32.mxu0 0.0
        %731 = vmatmul.mubr.f32.gmra.mxu0 %v599
        %v732 = vpop.f32.mrf.mxu0
        %v733 = vadd.f32 0.0, %v732
        %v734 = vpop.f32.mrf.mxu0
        %735 = vmatprep.mubr.f32.mxu0 0.0
        %736 = vmatmul.mubr.f32.gmra.mxu0 %v602
        %v737 = vpop.f32.mrf.mxu0
        %v738 = vadd.f32 0.0, %v737
        %v739 = vpop.f32.mrf.mxu0
        %740 = vmatprep.mubr.f32.mxu0 0.0
        %741 = vmatmul.mubr.f32.gmra.mxu0 %v605
        %v742 = vpop.f32.mrf.mxu0
        %v743 = vadd.f32 0.0, %v742
        %v744 = vpop.f32.mrf.mxu0
        %745 = vmatprep.mubr.f32.mxu0 0.0
        %746 = vmatmul.mubr.f32.gmra.mxu0 %v608
        %v747 = vpop.f32.mrf.mxu0
        %v748 = vadd.f32 0.0, %v747
        %v749 = vpop.f32.mrf.mxu0
        %750 = vmatprep.mubr.f32.mxu0 0.0
        %751 = vmatmul.mubr.f32.gmra.mxu0 %v611
        %v752 = vpop.f32.mrf.mxu0
        %v753 = vadd.f32 0.0, %v752
        %v754 = vpop.f32.mrf.mxu0
        %755 = vmatprep.mubr.f32.mxu0 0.0
        %756 = vmatmul.mubr.f32.gmra.mxu0 %v614
        %v757 = vpop.f32.mrf.mxu0
        %v758 = vadd.f32 0.0, %v757
        %v759 = vpop.f32.mrf.mxu0
        %760 = vdwg.mxu0
        %v762 = vsel %vm567, %v547, 0
        %v765 = vsel %vm567, %v548, 0
        %v768 = vsel %vm567, %v549, 0
        %v771 = vsel %vm567, %v550, 0
        %v774 = vsel %vm567, %v551, 0
        %v777 = vsel %vm567, %v552, 0
        %v780 = vsel %vm567, %v553, 0
        %v783 = vsel %vm567, %v554, 0
        %v786 = vsel %vm567, %v555, 0
        %v789 = vsel %vm567, %v556, 0
        %v792 = vsel %vm567, %v557, 0
        %v795 = vsel %vm567, %v558, 0
        %v798 = vsel %vm567, %v559, 0
        %v801 = vsel %vm567, %v560, 0
        %v804 = vsel %vm567, %v561, 0
        %v807 = vsel %vm567, %v562, 0
        %809 = vmatprep.subr.mxu0 0.0
        %810 = vmatpush1.msra.mxu0 0.0
        %811 = vmatprep.subr.mxu0 0.0
        %812 = vmatpush1.msra.mxu0 0.0
        %813 = vmatprep.subr.mxu0 0.0
        %814 = vmatpush1.msra.mxu0 0.0
        %815 = vmatprep.subr.mxu0 0.0
        %816 = vmatpush1.msra.mxu0 0.0
        %817 = vmatprep.subr.mxu0 0.0
        %818 = vmatpush1.msra.mxu0 0.0
        %819 = vmatprep.subr.mxu0 0.0
        %820 = vmatpush1.msra.mxu0 0.0
        %821 = vmatprep.subr.mxu0 0.0
        %822 = vmatpush1.msra.mxu0 0.0
        %823 = vmatprep.subr.mxu0 0.0
        %824 = vmatpush1.msra.mxu0 0.0
        %825 = vmatprep.subr.mxu0 0.0
        %826 = vmatpush1.msra.mxu0 0.0
        %827 = vmatprep.subr.mxu0 0.0
        %828 = vmatpush1.msra.mxu0 0.0
        %829 = vmatprep.subr.mxu0 0.0
        %830 = vmatpush1.msra.mxu0 0.0
        %831 = vmatprep.subr.mxu0 0.0
        %832 = vmatpush1.msra.mxu0 0.0
        %833 = vmatprep.subr.mxu0 0.0
        %834 = vmatpush1.msra.mxu0 %v566
        %835 = vmatprep.subr.mxu0 0.0
        %836 = vmatpush1.msra.mxu0 %v565
        %837 = vmatprep.subr.mxu0 0.0
        %838 = vmatpush1.msra.mxu0 %v564
        %839 = vmatprep.subr.mxu0 0.0
        %840 = vmatpush1.msra.mxu0 %v563
        %841 = vmatprep.subr.mxu0 0.0
        %842 = vmatpush2.msra.mxu0 0.0
        %843 = vmatprep.subr.mxu0 0.0
        %844 = vmatpush2.msra.mxu0 0.0
        %845 = vmatprep.subr.mxu0 0.0
        %846 = vmatpush2.msra.mxu0 0.0
        %847 = vmatprep.subr.mxu0 0.0
        %848 = vmatpush2.msra.mxu0 0.0
        %849 = vmatprep.subr.mxu0 0.0
        %850 = vmatpush2.msra.mxu0 0.0
        %851 = vmatprep.subr.mxu0 0.0
        %852 = vmatpush2.msra.mxu0 0.0
        %853 = vmatprep.subr.mxu0 0.0
        %854 = vmatpush2.msra.mxu0 0.0
        %855 = vmatprep.subr.mxu0 0.0
        %856 = vmatpush2.msra.mxu0 0.0
        %857 = vmatprep.subr.mxu0 0.0
        %858 = vmatpush2.msra.mxu0 0.0
        %859 = vmatprep.subr.mxu0 0.0
        %860 = vmatpush2.msra.mxu0 0.0
        %861 = vmatprep.subr.mxu0 0.0
        %862 = vmatpush2.msra.mxu0 0.0
        %863 = vmatprep.subr.mxu0 0.0
        %864 = vmatpush2.msra.mxu0 0.0
        %865 = vmatprep.subr.mxu0 0.0
        %866 = vmatpush2.msra.mxu0 0.0
        %867 = vmatprep.subr.mxu0 0.0
        %868 = vmatpush2.msra.mxu0 0.0
        %869 = vmatprep.subr.mxu0 0.0
        %870 = vmatpush2.msra.mxu0 0.0
        %871 = vmatprep.subr.mxu0 0.0
        %872 = vmatpush2.msra.mxu0 0.0
        %873 = vmatprep.mubr.f32.mxu0 0.0
        %874 = vmatmul.mubr.f32.gmra.mxu0 %v762
        %v875 = vpop.f32.mrf.mxu0
        %v876 = vadd.f32 0.0, %v875
        %v877 = vpop.f32.mrf.mxu0
        %878 = vmatprep.mubr.f32.mxu0 0.0
        %879 = vmatmul.mubr.f32.gmra.mxu0 %v765
        %v880 = vpop.f32.mrf.mxu0
        %v881 = vadd.f32 0.0, %v880
        %v882 = vpop.f32.mrf.mxu0
        %883 = vmatprep.mubr.f32.mxu0 0.0
        %884 = vmatmul.mubr.f32.gmra.mxu0 %v768
        %v885 = vpop.f32.mrf.mxu0
        %v886 = vadd.f32 0.0, %v885
        %v887 = vpop.f32.mrf.mxu0
        %888 = vmatprep.mubr.f32.mxu0 0.0
        %889 = vmatmul.mubr.f32.gmra.mxu0 %v771
        %v890 = vpop.f32.mrf.mxu0
        %v891 = vadd.f32 0.0, %v890
        %v892 = vpop.f32.mrf.mxu0
        %893 = vmatprep.mubr.f32.mxu0 0.0
        %894 = vmatmul.mubr.f32.gmra.mxu0 %v774
        %v895 = vpop.f32.mrf.mxu0
        %v896 = vadd.f32 0.0, %v895
        %v897 = vpop.f32.mrf.mxu0
        %898 = vmatprep.mubr.f32.mxu0 0.0
        %899 = vmatmul.mubr.f32.gmra.mxu0 %v777
        %v900 = vpop.f32.mrf.mxu0
        %v901 = vadd.f32 0.0, %v900
        %v902 = vpop.f32.mrf.mxu0
        %903 = vmatprep.mubr.f32.mxu0 0.0
        %904 = vmatmul.mubr.f32.gmra.mxu0 %v780
        %v905 = vpop.f32.mrf.mxu0
        %v906 = vadd.f32 0.0, %v905
        %v907 = vpop.f32.mrf.mxu0
        %908 = vmatprep.mubr.f32.mxu0 0.0
        %909 = vmatmul.mubr.f32.gmra.mxu0 %v783
        %v910 = vpop.f32.mrf.mxu0
        %v911 = vadd.f32 0.0, %v910
        %v912 = vpop.f32.mrf.mxu0
        %913 = vmatprep.mubr.f32.mxu0 0.0
        %914 = vmatmul.mubr.f32.gmra.mxu0 %v786
        %v915 = vpop.f32.mrf.mxu0
        %v916 = vadd.f32 0.0, %v915
        %v917 = vpop.f32.mrf.mxu0
        %918 = vmatprep.mubr.f32.mxu0 0.0
        %919 = vmatmul.mubr.f32.gmra.mxu0 %v789
        %v920 = vpop.f32.mrf.mxu0
        %v921 = vadd.f32 0.0, %v920
        %v922 = vpop.f32.mrf.mxu0
        %923 = vmatprep.mubr.f32.mxu0 0.0
        %924 = vmatmul.mubr.f32.gmra.mxu0 %v792
        %v925 = vpop.f32.mrf.mxu0
        %v926 = vadd.f32 0.0, %v925
        %v927 = vpop.f32.mrf.mxu0
        %928 = vmatprep.mubr.f32.mxu0 0.0
        %929 = vmatmul.mubr.f32.gmra.mxu0 %v795
        %v930 = vpop.f32.mrf.mxu0
        %v931 = vadd.f32 0.0, %v930
        %v932 = vpop.f32.mrf.mxu0
        %933 = vmatprep.mubr.f32.mxu0 0.0
        %934 = vmatmul.mubr.f32.gmra.mxu0 %v798
        %v935 = vpop.f32.mrf.mxu0
        %v936 = vadd.f32 0.0, %v935
        %v937 = vpop.f32.mrf.mxu0
        %938 = vmatprep.mubr.f32.mxu0 0.0
        %939 = vmatmul.mubr.f32.gmra.mxu0 %v801
        %v940 = vpop.f32.mrf.mxu0
        %v941 = vadd.f32 0.0, %v940
        %v942 = vpop.f32.mrf.mxu0
        %943 = vmatprep.mubr.f32.mxu0 0.0
        %944 = vmatmul.mubr.f32.gmra.mxu0 %v804
        %v945 = vpop.f32.mrf.mxu0
        %v946 = vadd.f32 0.0, %v945
        %v947 = vpop.f32.mrf.mxu0
        %948 = vmatprep.mubr.f32.mxu0 0.0
        %949 = vmatmul.mubr.f32.gmra.mxu0 %v807
        %v950 = vpop.f32.mrf.mxu0
        %v951 = vadd.f32 0.0, %v950
        %v952 = vpop.f32.mrf.mxu0
        %953 = vdwg.mxu0
        %v954 = vmul.f32 %v547, %v683
        %v955 = vmul.f32 %v548, %v688
        %v956 = vmul.f32 %v549, %v693
        %v957 = vmul.f32 %v550, %v698
        %v958 = vmul.f32 %v551, %v703
        %v959 = vmul.f32 %v552, %v708
        %v960 = vmul.f32 %v553, %v713
        %v961 = vmul.f32 %v554, %v718
        %v962 = vmul.f32 %v555, %v723
        %v963 = vmul.f32 %v556, %v728
        %v964 = vmul.f32 %v557, %v733
        %v965 = vmul.f32 %v558, %v738
        %v966 = vmul.f32 %v559, %v743
        %v967 = vmul.f32 %v560, %v748
        %v968 = vmul.f32 %v561, %v753
        %v969 = vmul.f32 %v562, %v758
        %v970 = vmul.f32 %v499, %v876
        %v971 = vmul.f32 %v500, %v881
        %v972 = vmul.f32 %v501, %v886
        %v973 = vmul.f32 %v502, %v891
        %v974 = vmul.f32 %v503, %v896
        %v975 = vmul.f32 %v504, %v901
        %v976 = vmul.f32 %v505, %v906
        %v977 = vmul.f32 %v506, %v911
        %v978 = vmul.f32 %v507, %v916
        %v979 = vmul.f32 %v508, %v921
        %v980 = vmul.f32 %v509, %v926
        %v981 = vmul.f32 %v510, %v931
        %v982 = vmul.f32 %v511, %v936
        %v983 = vmul.f32 %v512, %v941
        %v984 = vmul.f32 %v513, %v946
        %v985 = vmul.f32 %v514, %v951
        %v986 = vsub.f32 %v954, %v970
        %v987 = vsub.f32 %v955, %v971
        %v988 = vsub.f32 %v956, %v972
        %v989 = vsub.f32 %v957, %v973
        %v990 = vsub.f32 %v958, %v974
        %v991 = vsub.f32 %v959, %v975
        %v992 = vsub.f32 %v960, %v976
        %v993 = vsub.f32 %v961, %v977
        %v994 = vsub.f32 %v962, %v978
        %v995 = vsub.f32 %v963, %v979
        %v996 = vsub.f32 %v964, %v980
        %v997 = vsub.f32 %v965, %v981
        %v998 = vsub.f32 %v966, %v982
        %v999 = vsub.f32 %v967, %v983
        %v1000 = vsub.f32 %v968, %v984
        %v1001 = vsub.f32 %v969, %v985
        %v1002 = vmul.f32 %v986, 2.0
        %v1003 = vmul.f32 %v987, 2.0
        %v1004 = vmul.f32 %v988, 2.0
        %v1005 = vmul.f32 %v989, 2.0
        %v1006 = vmul.f32 %v990, 2.0
        %v1007 = vmul.f32 %v991, 2.0
        %v1008 = vmul.f32 %v992, 2.0
        %v1009 = vmul.f32 %v993, 2.0
        %v1010 = vmul.f32 %v994, 2.0
        %v1011 = vmul.f32 %v995, 2.0
        %v1012 = vmul.f32 %v996, 2.0
        %v1013 = vmul.f32 %v997, 2.0
        %v1014 = vmul.f32 %v998, 2.0
        %v1015 = vmul.f32 %v999, 2.0
        %v1016 = vmul.f32 %v1000, 2.0
        %v1017 = vmul.f32 %v1001, 2.0
        %v1018 = vmul.f32 %v499, %v499
        %v1019 = vmul.f32 %v500, %v500
        %v1020 = vmul.f32 %v501, %v501
        %v1021 = vmul.f32 %v502, %v502
        %v1022 = vmul.f32 %v503, %v503
        %v1023 = vmul.f32 %v504, %v504
        %v1024 = vmul.f32 %v505, %v505
        %v1025 = vmul.f32 %v506, %v506
        %v1026 = vmul.f32 %v507, %v507
        %v1027 = vmul.f32 %v508, %v508
        %v1028 = vmul.f32 %v509, %v509
        %v1029 = vmul.f32 %v510, %v510
        %v1030 = vmul.f32 %v511, %v511
        %v1031 = vmul.f32 %v512, %v512
        %v1032 = vmul.f32 %v513, %v513
        %v1033 = vmul.f32 %v514, %v514
        %v1034 = vmul.f32 %v1018, %v515
        %v1035 = vmul.f32 %v1019, %v516
        %v1036 = vmul.f32 %v1020, %v517
        %v1037 = vmul.f32 %v1021, %v518
        %v1038 = vmul.f32 %v1022, %v519
        %v1039 = vmul.f32 %v1023, %v520
        %v1040 = vmul.f32 %v1024, %v521
        %v1041 = vmul.f32 %v1025, %v522
        %v1042 = vmul.f32 %v1026, %v523
        %v1043 = vmul.f32 %v1027, %v524
        %v1044 = vmul.f32 %v1028, %v525
        %v1045 = vmul.f32 %v1029, %v526
        %v1046 = vmul.f32 %v1030, %v527
        %v1047 = vmul.f32 %v1031, %v528
        %v1048 = vmul.f32 %v1032, %v529
        %v1049 = vmul.f32 %v1033, %v530
        %v1050 = vmul.f32 %v1034, 0.33333334
        %v1051 = vmul.f32 %v1035, 0.33333334
        %v1052 = vmul.f32 %v1036, 0.33333334
        %v1053 = vmul.f32 %v1037, 0.33333334
        %v1054 = vmul.f32 %v1038, 0.33333334
        %v1055 = vmul.f32 %v1039, 0.33333334
        %v1056 = vmul.f32 %v1040, 0.33333334
        %v1057 = vmul.f32 %v1041, 0.33333334
        %v1058 = vmul.f32 %v1042, 0.33333334
        %v1059 = vmul.f32 %v1043, 0.33333334
        %v1060 = vmul.f32 %v1044, 0.33333334
        %v1061 = vmul.f32 %v1045, 0.33333334
        %v1062 = vmul.f32 %v1046, 0.33333334
        %v1063 = vmul.f32 %v1047, 0.33333334
        %v1064 = vmul.f32 %v1048, 0.33333334
        %v1065 = vmul.f32 %v1049, 0.33333334
        %v1066 = vadd.f32 %v1002, %v1050
        %v1067 = vadd.f32 %v1003, %v1051
        %v1068 = vadd.f32 %v1004, %v1052
        %v1069 = vadd.f32 %v1005, %v1053
        %v1070 = vadd.f32 %v1006, %v1054
        %v1071 = vadd.f32 %v1007, %v1055
        %v1072 = vadd.f32 %v1008, %v1056
        %v1073 = vadd.f32 %v1009, %v1057
        %v1074 = vadd.f32 %v1010, %v1058
        %v1075 = vadd.f32 %v1011, %v1059
        %v1076 = vadd.f32 %v1012, %v1060
        %v1077 = vadd.f32 %v1013, %v1061
        %v1078 = vadd.f32 %v1014, %v1062
        %v1079 = vadd.f32 %v1015, %v1063
        %v1080 = vadd.f32 %v1016, %v1064
        %v1081 = vadd.f32 %v1017, %v1065
        %v1082 = vsel %vm567, %v1066, 0.0
        %1083 = vadd.xlane.f32.xlu0 %v1082
        %v1084 = vpop.xlane.xlu0 %1083
        %v1085 = vsel %vm567, %v1067, 0.0
        %1086 = vadd.xlane.f32.xlu0 %v1085
        %v1087 = vpop.xlane.xlu0 %1086
        %v1088 = vsel %vm567, %v1068, 0.0
        %1089 = vadd.xlane.f32.xlu0 %v1088
        %v1090 = vpop.xlane.xlu0 %1089
        %v1091 = vsel %vm567, %v1069, 0.0
        %1092 = vadd.xlane.f32.xlu0 %v1091
        %v1093 = vpop.xlane.xlu0 %1092
        %v1094 = vsel %vm567, %v1070, 0.0
        %1095 = vadd.xlane.f32.xlu0 %v1094
        %v1096 = vpop.xlane.xlu0 %1095
        %v1097 = vsel %vm567, %v1071, 0.0
        %1098 = vadd.xlane.f32.xlu0 %v1097
        %v1099 = vpop.xlane.xlu0 %1098
        %v1100 = vsel %vm567, %v1072, 0.0
        %1101 = vadd.xlane.f32.xlu0 %v1100
        %v1102 = vpop.xlane.xlu0 %1101
        %v1103 = vsel %vm567, %v1073, 0.0
        %1104 = vadd.xlane.f32.xlu0 %v1103
        %v1105 = vpop.xlane.xlu0 %1104
        %v1106 = vsel %vm567, %v1074, 0.0
        %1107 = vadd.xlane.f32.xlu0 %v1106
        %v1108 = vpop.xlane.xlu0 %1107
        %v1109 = vsel %vm567, %v1075, 0.0
        %1110 = vadd.xlane.f32.xlu0 %v1109
        %v1111 = vpop.xlane.xlu0 %1110
        %v1112 = vsel %vm567, %v1076, 0.0
        %1113 = vadd.xlane.f32.xlu0 %v1112
        %v1114 = vpop.xlane.xlu0 %1113
        %v1115 = vsel %vm567, %v1077, 0.0
        %1116 = vadd.xlane.f32.xlu0 %v1115
        %v1117 = vpop.xlane.xlu0 %1116
        %v1118 = vsel %vm567, %v1078, 0.0
        %1119 = vadd.xlane.f32.xlu0 %v1118
        %v1120 = vpop.xlane.xlu0 %1119
        %v1121 = vsel %vm567, %v1079, 0.0
        %1122 = vadd.xlane.f32.xlu0 %v1121
        %v1123 = vpop.xlane.xlu0 %1122
        %v1124 = vsel %vm567, %v1080, 0.0
        %1125 = vadd.xlane.f32.xlu0 %v1124
        %v1126 = vpop.xlane.xlu0 %1125
        %v1127 = vsel %vm567, %v1081, 0.0
        %1128 = vadd.xlane.f32.xlu0 %v1127
        %v1129 = vpop.xlane.xlu0 %1128
        %v1130 = vmul.f32 %v1084, 0.001
        %v1131 = vmul.f32 %v1087, 0.001
        %v1132 = vmul.f32 %v1090, 0.001
        %v1133 = vmul.f32 %v1093, 0.001
        %v1134 = vmul.f32 %v1096, 0.001
        %v1135 = vmul.f32 %v1099, 0.001
        %v1136 = vmul.f32 %v1102, 0.001
        %v1137 = vmul.f32 %v1105, 0.001
        %v1138 = vmul.f32 %v1108, 0.001
        %v1139 = vmul.f32 %v1111, 0.001
        %v1140 = vmul.f32 %v1114, 0.001
        %v1141 = vmul.f32 %v1117, 0.001
        %v1142 = vmul.f32 %v1120, 0.001
        %v1143 = vmul.f32 %v1123, 0.001
        %v1144 = vmul.f32 %v1126, 0.001
        %v1145 = vmul.f32 %v1129, 0.001
        %vm1146 = vcmask 7168
        %1147 = vst.msk [vmem:[%s451] sm:$0xff] %vm1146, %v1130
        %1148 = vst.msk [vmem:[%s451 + $0x8] sm:$0xff] %vm1146, %v1131
        %1149 = vst.msk [vmem:[%s451 + $0x10] sm:$0xff] %vm1146, %v1132
        %1150 = vst.msk [vmem:[%s451 + $0x18] sm:$0xff] %vm1146, %v1133
        %1151 = vst.msk [vmem:[%s451 + $0x20] sm:$0xff] %vm1146, %v1134
        %1152 = vst.msk [vmem:[%s451 + $0x28] sm:$0xff] %vm1146, %v1135
        %1153 = vst.msk [vmem:[%s451 + $0x30] sm:$0xff] %vm1146, %v1136
        %1154 = vst.msk [vmem:[%s451 + $0x38] sm:$0xff] %vm1146, %v1137
        %1155 = vst.msk [vmem:[%s451 + $0x40] sm:$0xff] %vm1146, %v1138
        %1156 = vst.msk [vmem:[%s451 + $0x48] sm:$0xff] %vm1146, %v1139
        %1157 = vst.msk [vmem:[%s451 + $0x50] sm:$0xff] %vm1146, %v1140
        %1158 = vst.msk [vmem:[%s451 + $0x58] sm:$0xff] %vm1146, %v1141
        %1159 = vst.msk [vmem:[%s451 + $0x60] sm:$0xff] %vm1146, %v1142
        %1160 = vst.msk [vmem:[%s451 + $0x68] sm:$0xff] %vm1146, %v1143
        %1161 = vst.msk [vmem:[%s451 + $0x70] sm:$0xff] %vm1146, %v1144
        %1162 = vst.msk [vmem:[%s451 + $0x78] sm:$0xff] %vm1146, %v1145
        %s1163 = sand.u32 %s235, 1
        %s1164 = scalar_lea.sflag [#allocation3], %s1163
        %s1165 = sand.u32 %s235, 1
        %s1166 = smul.addr %s1165, 4
        %s1167 = scalar_lea.vmem [#allocation2], %s1166
        %s1168 = smul.u32 16, %s24
        %p1169 = scmp.lt.s32.totalorder %s1168, 31
        %s1170 = scalar_select %p1169, %s1168, 31
        %s1171 = smul.addr %s1170, 8
        %s1172 = scalar_lea.vmem %s9, %s1171
        // Predicated region
        $region53: #{tpu_custom_call.1} parent=51 // pred_check
          %p1173 = pneg %p245
        $region54: #{tpu_custom_call.1} parent=51 // pred_check_branch
          %1175 = sbr.rel (%p1173) target = $region56
        $region55: #{tpu_custom_call.1} parent=51 // pred_region
          %s1177 = ssub.s32 64, 64
          %1178 = vsyncadd %s1164, %s1177
          %s1179 = smul.addr %s24, 64
          %s1180 = scalar_lea.hbm %s8, %s1179
          %s1182 = sshll.u32 %s1167, 4
          %s1183 = int_to_ptr.vmem [resolvable:$true] %s1182
          %1185 = dma.vmem_to_hbm [thread:$0]  %s1183, 64, %s1180, %s1164
        $region56: #{tpu_custom_call.1} parent=51 // pred_fallthru
          _
        // Predicated region
        $region57: #{tpu_custom_call.1} parent=51 // pred_check
          %p1186 = pneg %p271
        $region58: #{tpu_custom_call.1} parent=51 // pred_check_branch
          %1188 = sbr.rel (%p1186) target = $region60
        $region59: #{tpu_custom_call.1} parent=51 // pred_region
          %s1189 = smul.u32 16, %s24
        $region60: #{tpu_custom_call.1} parent=51 // pred_fallthru
          _
      $region52: #{tpu_custom_call.1} parent=5 // pred_fallthru
        _
      %p1190 = scmp.le.s32.totalorder 2, %s19
      // Predicated region
      $region61: #{tpu_custom_call.1} parent=5 // pred_check
        %p1191 = pneg %p1190
      $region62: #{tpu_custom_call.1} parent=5 // pred_check_branch
        %1193 = sbr.rel (%p1191) target = $region64
      $region63: #{tpu_custom_call.1} parent=5 // pred_region
        %s1194 = ssub.s32 %s19, 2
        // Predicated region
        $region65: #{tpu_custom_call.1} parent=63 // pred_check
          %p1195 = pneg %p251
        $region66: #{tpu_custom_call.1} parent=63 // pred_check_branch
          %1197 = sbr.rel (%p1195) target = $region68
        $region67: #{tpu_custom_call.1} parent=63 // pred_region
          %s1198 = sand.u32 %s236, 1
          %s1199 = scalar_lea.sflag [#allocation3], %s1198
          %s1200 = sand.u32 %s236, 1
          %s1201 = smul.addr %s1200, 4
          %s1202 = scalar_lea.vmem [#allocation2], %s1201
          %1203 = dma.done %s1199, 64
        $region68: #{tpu_custom_call.1} parent=63 // pred_fallthru
          _
        // Predicated region
        $region69: #{tpu_custom_call.1} parent=63 // pred_check
          %p1204 = pneg %p277
        $region70: #{tpu_custom_call.1} parent=63 // pred_check_branch
          %1206 = sbr.rel (%p1204) target = $region72
        $region71: #{tpu_custom_call.1} parent=63 // pred_region
          %s1207 = smul.u32 16, %s25
          %p1208 = scmp.lt.s32.totalorder %s1207, 31
          %s1209 = scalar_select %p1208, %s1207, 31
          %s1210 = smul.addr %s1209, 8
          %s1211 = scalar_lea.vmem %s9, %s1210
        $region72: #{tpu_custom_call.1} parent=63 // pred_fallthru
          _
      $region64: #{tpu_custom_call.1} parent=5 // pred_fallthru
        _
    $region6: #{tpu_custom_call.1} parent=1 // loop_footer
      %s23 = sadd.s32 1, %s19
    $region7: #{tpu_custom_call.1} parent=1 // loop_footer_branch
      %18 = sbr.rel target = $region3
    $region8: #{tpu_custom_call.1} parent=1 // loop_exit
      _
    %1212 = vsyncpa [#allocation3], 1
    %s1213 = scalar_lea.sflag [#allocation3], 1
    %1214 = vsyncpa %s1213, 1

</llo_original>
